<compile_context>
chip_gen: v5e
topology: v5e:2x2
jax: 0.10.0
libtpu: 0.0.40
codegen_flags: <defaults>
</compile_context>

<pallas_src>
import jax
import jax.numpy as jnp
from jax.experimental import pallas as pl
from jax.experimental.pallas import tpu as pltpu

NEG_SLOPE = 0.01  # nn.LeakyReLU default

# Lane-dense widths to try for the flattened view (largest first).
_LANE_WIDTHS = (4096, 2048, 1024, 512, 256, 128)


def _leaky_relu_kernel(x_ref, o_ref):
    """Elementwise LeakyReLU on one VMEM tile."""
    x = x_ref[...]
    # max(x, slope*x) == LeakyReLU(x) for 0 < slope < 1 (2 VALU ops vs 3).
    o_ref[...] = jnp.maximum(x, NEG_SLOPE * x).astype(o_ref.dtype)


def _chip_defaults():
    """Per-generation (target block bytes, scoped-VMEM override, # TensorCores)."""
    try:
        kind = jax.devices()[0].device_kind.lower()
    except Exception:
        kind = ""
    if "v7" in kind:
        # ~3.2 TB/s HBM per TC: 8 MiB blocks keep step overhead <10%.  The 4x
        # double-buffered footprint (~32 MiB) exceeds the 32 MiB scoped default
        # on v7x, so raise the limit explicitly (physical VMEM is 64 MiB).
        return 8 << 20, 40 << 20, 2
    if "v6" in kind:
        # 4 MiB blocks -> 16 MiB pipeline, under the 32 MiB scoped default.
        return 4 << 20, None, 1
    # v5e (16 MiB scoped default, ~820 GB/s HBM) and unknown chips: stay safe.
    return 2 << 20, None, 1


def tree_activation(
    h: jax.Array,
    *,
    min_pallas_bytes: int = 1 << 20,
    target_block_bytes: int | None = None,
    vmem_limit_bytes: int | None = None,
    donate: bool = False,
) -> jax.Array:
    """Apply TreeActivation (LeakyReLU) to node features h (any shape).

    Equivalent to:  g.ndata['h'] = nn.LeakyReLU()(g.ndata['h'])

    Set donate=True only when the caller actually donates h's buffer; otherwise
    aliasing would force XLA to insert a defensive copy (extra HBM traffic).
    """
    orig_shape = h.shape
    total = int(h.size)
    itemsize = jnp.dtype(h.dtype).itemsize
    total_bytes = total * itemsize

    # Tiny tensors: a pallas_call launch + lost fusion costs more than the op.
    if total == 0 or total_bytes < min_pallas_bytes:
        return jnp.maximum(h, NEG_SLOPE * h)

    chip_block, chip_vmem, num_cores = _chip_defaults()
    if target_block_bytes is None:
        target_block_bytes = chip_block
    if vmem_limit_bytes is None:
        vmem_limit_bytes = chip_vmem

    # --- Lane-dense 2D view (elementwise op, so any reshape is semantically free)
    width = None
    for w in _LANE_WIDTHS:
        if total % w == 0:
            width = w
            break
    if width is not None:
        x2d = h.reshape(total // width, width)
    else:
        # Fallback: native [N, H] layout, full last dim per block (legal even
        # when H is not a multiple of 128 because the block spans the full dim).
        x2d = h.reshape(-1, orig_shape[-1]) if h.ndim >= 2 else h.reshape(1, total)
        width = x2d.shape[1]
    rows = x2d.shape[0]

    # dtype-aware sublane multiple: 8 for f32, 16 for bf16, 32 for int8/fp8.
    sub = 8 * max(1, 4 // itemsize)
    # VMEM tiles are lane-padded to 128 -> size blocks by the padded width so
    # the narrow-H fallback doesn't blow the scoped VMEM limit.
    padded_width = pl.cdiv(width, 128) * 128

    rows_per_block = (target_block_bytes // (padded_width * itemsize)) // sub * sub
    rows_per_block = max(sub, rows_per_block)

    if rows <= rows_per_block:
        block_rows = rows                      # single full-extent block
    else:
        block_rows = rows_per_block            # sublane-aligned; last block partial

    # Megacore (v7x): make sure both TensorCores get work for mid-sized inputs
    # (an even number of >=2 grid steps; no-op on single-TC v5e/v6e).
    if num_cores >= 2 and total_bytes > (512 << 10):
        n_blocks = pl.cdiv(rows, block_rows)
        if n_blocks < 2 or n_blocks % 2 == 1:
            target_blocks = max(2, n_blocks + (n_blocks % 2))
            cand = pl.cdiv(pl.cdiv(rows, target_blocks), sub) * sub
            if sub <= cand < rows:
                block_rows = cand

    grid = (pl.cdiv(rows, block_rows),)

    out2d = pl.pallas_call(
        _leaky_relu_kernel,
        out_shape=jax.ShapeDtypeStruct(x2d.shape, x2d.dtype),
        grid=grid,
        in_specs=[pl.BlockSpec((block_rows, width), lambda i: (i, 0))],
        out_specs=pl.BlockSpec((block_rows, width), lambda i: (i, 0)),
        input_output_aliases=({0: 0} if donate else {}),
        compiler_params=pltpu.CompilerParams(
            dimension_semantics=("parallel",),
            vmem_limit_bytes=vmem_limit_bytes,
        ),
    )(x2d)
    return out2d.reshape(orig_shape)


def tree_activation_ref(h: jax.Array) -> jax.Array:
    """Pure-JAX reference (matches torch.nn.LeakyReLU semantics)."""
    return jnp.where(h >= 0, h, NEG_SLOPE * h)


if __name__ == "__main__":
    key = jax.random.PRNGKey(0)
    k1, k2, k3, k4 = jax.random.split(key, 4)

    # Case 1: tiny graph -> pure-JAX path (below min_pallas_bytes).
    h_small = jax.random.normal(k1, (16, 32), dtype=jnp.float32)
    # Case 2: lane-dense reshape (600*96 divisible by 256), multi-block grid
    # with a partial last block (small target_block_bytes to force >1 step).
    h_mid = jax.random.normal(k2, (600, 96), dtype=jnp.float32)
    # Case 3: odd hidden size (H=33) -> native-layout fallback, padded-width sizing.
    h_odd = jax.random.normal(k3, (40, 33), dtype=jnp.float32)
    # Case 4: bf16 features -> 16-row sublane rounding, 2-step grid.
    h_bf16 = jax.random.normal(k4, (512, 256), dtype=jnp.float32).astype(jnp.bfloat16)

    inputs = (h_small, h_mid, h_odd, h_bf16)
    refs = [tree_activation_ref(x) for x in inputs]

    out_small = tree_activation(h_small)
    out_mid = tree_activation(h_mid, min_pallas_bytes=0, target_block_bytes=64 * 1024)
    out_odd = tree_activation(h_odd, min_pallas_bytes=0)
    out_bf16 = tree_activation(h_bf16, min_pallas_bytes=0, target_block_bytes=64 * 1024)
    # Exercise the donation-gated alias path too.
    out_mid_donated = tree_activation(
        h_mid, min_pallas_bytes=0, target_block_bytes=64 * 1024, donate=True
    )

    outs = jax.block_until_ready((out_small, out_mid, out_odd, out_bf16, out_mid_donated))
    for out, ref, x in zip(outs[:4], refs, inputs):
        assert out.shape == x.shape and out.dtype == x.dtype
        tol = 1e-2 if x.dtype == jnp.bfloat16 else 1e-6
        assert jnp.allclose(out.astype(jnp.float32), ref.astype(jnp.float32),
                            atol=tol, rtol=tol)
    assert jnp.allclose(outs[4], refs[1], atol=1e-6, rtol=1e-6)

    print("KERNEL_OK")
</pallas_src>

<mosaic_0001>
module attributes {stable_mosaic.version = 11 : i64} {
  func.func @_leaky_relu_kernel(%arg0: i32, %arg1: memref<64x256xf32, #tpu.memory_space<vmem>>, %arg2: memref<64x256xf32, #tpu.memory_space<vmem>>) attributes {dimension_semantics = [#tpu.dimension_semantics<parallel>], iteration_bounds = array<i64: 4>, scalar_prefetch = 0 : i64, scratch_operands = 0 : i64, tpu.core_type = #tpu.core_type<tc>, window_params = [{transform_indices = @transform_0, window_bounds = array<i64: 64, 256>}, {transform_indices = @transform_1, window_bounds = array<i64: 64, 256>}]} {
    %c0 = arith.constant 0 : index
    %c0_0 = arith.constant 0 : index
    %0 = vector.load %arg1[%c0, %c0_0] : memref<64x256xf32, #tpu.memory_space<vmem>>, vector<64x256xf32>
    %cst = arith.constant 0.00999999977 : f32
    %1 = vector.broadcast %cst : f32 to vector<64x256xf32>
    %2 = arith.mulf %1, %0 : vector<64x256xf32>
    %3 = arith.maximumf %0, %2 : vector<64x256xf32>
    %c0_1 = arith.constant 0 : index
    %c0_2 = arith.constant 0 : index
    %4 = vector.load %arg2[%c0_1, %c0_2] : memref<64x256xf32, #tpu.memory_space<vmem>>, vector<64x256xf32>
    tpu.vector_store %arg2[%c0_1, %c0_2], %3 {strides = array<i32>} : memref<64x256xf32, #tpu.memory_space<vmem>>, vector<64x256xf32>,
    return
  }
  func.func @transform_0(%arg0: i32) -> (i32, i32) {
    %c0_i32 = arith.constant 0 : i32
    %c0_i32_0 = arith.constant 0 : i32
    return %arg0, %c0_i32 : i32, i32
  }
  func.func @transform_1(%arg0: i32) -> (i32, i32) {
    %c0_i32 = arith.constant 0 : i32
    %c0_i32_0 = arith.constant 0 : i32
    return %arg0, %c0_i32 : i32, i32
  }
}

</mosaic_0001>

<llo_original>
// kernel: tpu_custom_call.1
$region0: #{tpu_custom_call.1}
  #allocation0 [shape = 'u32[]', space=smem, size = 0x4, offset = 0x4, fixed_abs, tag = 'smem constant byte address 0x4 - core index']
  #allocation1 [shape = 'u32[72,128]{1,0:T(1,128)}', space=vmem, size = 0x9000, scoped, tag = 'internal scratch']
  %s0 = inlined_call_operand.hbm [shape: f32[225,256], index: 0, kind: input, shape index: {}]
  %s1 = inlined_call_operand.hbm [shape: f32[225,256], index: 1, kind: output, shape index: {}]
  %s2 = sld [smem:[#allocation0]]
  $region41: #{tpu_custom_call.1} parent=0
    _
  %s4 = ssub.s32 1, %s2
  %s5 = scalar_select 0, %s4, %s2
  $region1: #{tpu_custom_call.1} parent=0
    #allocation2 [shape = 'u8[131072]{0}', space=vmem, size = 0x20000, scoped, tag = 'input window, operand 0']
    #allocation3 [shape = 's32[2]{0}', space=sflag, size = 0x8, scoped, tag = 'scoped memory for tpu_custom_call.1']
    #allocation4 [shape = 's32[2]{0}', space=sflag, size = 0x8, scoped, tag = 'scoped memory for tpu_custom_call.1']
    #allocation5 [shape = 'u8[131072]{0}', space=vmem, size = 0x20000, scoped, tag = 'output window, operand 0']
    %6 = vsyncpa [#allocation3], 0
    %s7 = scalar_lea.sflag [#allocation3], 1
    %8 = vsyncpa %s7, 0
    %9 = vsyncpa [#allocation4], 0
    %s10 = scalar_lea.sflag [#allocation4], 1
    %11 = vsyncpa %s10, 0
    loop: start=0, step=1, limit=6
    $region2: #{tpu_custom_call.1} parent=1 // loop_pre_header
      _
    $region3: #{tpu_custom_call.1} parent=1 // loop_header
      %s13 = sphi 0, %s17
      %p14 = scmp.ge.s32.totalorder %s13, 6
      %s23 = sphi 0, %s25
      %s26 = sphi 0, %s23
      %s27 = sphi 0, %s26
      %s43 = sphi 0, %s27
      %s49 = sphi 0, %s51
      %s52 = sphi 0, %s49
      %s53 = sphi 0, %s52
      %s69 = sphi 0, %s53
    $region4: #{tpu_custom_call.1} parent=1 // loop_header_branch
      %16 = sbr.rel (%p14) target = $region8
    $region5: #{tpu_custom_call.1} parent=1 // loop_body
      %s18 = ssub.s32 %s13, 1
      %s19 = ssub.s32 %s13, 2
      %s20 = sadd.s32 %s13, 1
      %s21 = ssub.s32 %s13, %s20
      %p22 = scmp.eq.s32.totalorder %s21, 0
      %s24 = sadd.s32 %s23, 1
      %s25 = scalar_select %p22, %s23, %s24
      %p28 = pneg %p22
      %p29 = scmp.eq.s32.totalorder %s13, 3
      %p30 = por %p28, %p29
      %p31 = scmp.ne.s32.totalorder %s23, %s26
      %p32 = scmp.eq.s32.totalorder %s13, 0
      %p33 = por %p31, %p32
      %p34 = scmp.ne.s32.totalorder %s23, %s26
      %p35 = scmp.eq.s32.totalorder %s18, 3
      %p36 = por %p34, %p35
      %p37 = scmp.ne.s32.totalorder %s26, %s27
      %p38 = scmp.eq.s32.totalorder %s18, 0
      %p39 = por %p37, %p38
      %p40 = scmp.ne.s32.totalorder %s26, %s27
      %p41 = scmp.eq.s32.totalorder %s19, 3
      %p42 = por %p40, %p41
      %p44 = scmp.ne.s32.totalorder %s27, %s43
      %p45 = scmp.eq.s32.totalorder %s19, 0
      %p46 = por %p44, %p45
      %s47 = ssub.s32 %s13, %s20
      %p48 = scmp.eq.s32.totalorder %s47, 0
      %s50 = sadd.s32 %s49, 1
      %s51 = scalar_select %p48, %s49, %s50
      %p54 = pneg %p48
      %p55 = scmp.eq.s32.totalorder %s13, 3
      %p56 = por %p54, %p55
      %p57 = scmp.ne.s32.totalorder %s49, %s52
      %p58 = scmp.eq.s32.totalorder %s13, 0
      %p59 = por %p57, %p58
      %p60 = scmp.ne.s32.totalorder %s49, %s52
      %p61 = scmp.eq.s32.totalorder %s18, 3
      %p62 = por %p60, %p61
      %p63 = scmp.ne.s32.totalorder %s52, %s53
      %p64 = scmp.eq.s32.totalorder %s18, 0
      %p65 = por %p63, %p64
      %p66 = scmp.ne.s32.totalorder %s52, %s53
      %p67 = scmp.eq.s32.totalorder %s19, 3
      %p68 = por %p66, %p67
      %p70 = scmp.ne.s32.totalorder %s53, %s69
      %p71 = scmp.eq.s32.totalorder %s19, 0
      %p72 = por %p70, %p71
      %p73 = scmp.le.s32.totalorder 1, %s13
      %p74 = scmp.lt.s32.totalorder %s13, 5
      %p75 = pnand %p73, %p74
      %p76 = pneg %p75
      // Predicated region
      $region9: #{tpu_custom_call.1} parent=5 // pred_check
        _
      $region10: #{tpu_custom_call.1} parent=5 // pred_check_branch
        %78 = sbr.rel (%p75) target = $region12
      $region11: #{tpu_custom_call.1} parent=5 // pred_region
        %s79 = ssub.s32 %s13, 1
      $region12: #{tpu_custom_call.1} parent=5 // pred_fallthru
        _
      %p80 = scmp.lt.s32.totalorder %s13, 4
      // Predicated region
      $region13: #{tpu_custom_call.1} parent=5 // pred_check
        %p81 = pneg %p80
      $region14: #{tpu_custom_call.1} parent=5 // pred_check_branch
        %83 = sbr.rel (%p81) target = $region16
      $region15: #{tpu_custom_call.1} parent=5 // pred_region
        // Predicated region
        $region17: #{tpu_custom_call.1} parent=15 // pred_check
          %p84 = pneg %p33
        $region18: #{tpu_custom_call.1} parent=15 // pred_check_branch
          %86 = sbr.rel (%p84) target = $region20
        $region19: #{tpu_custom_call.1} parent=15 // pred_region
          %s87 = sand.u32 %s23, 1
          %s88 = scalar_lea.sflag [#allocation3], %s87
          %s89 = sand.u32 %s23, 1
          %s90 = smul.addr %s89, 128
          %s91 = scalar_lea.vmem [#allocation2], %s90
          %s92 = smul.u32 8, %s13
          %s93 = ssub.s32 29, %s92
          %p94 = scmp.lt.s32.totalorder %s93, 8
          %s95 = scalar_select %p94, %s93, 8
          %s96 = smul.u32 8, %s95
          %s97 = smul.u32 %s96, 2
          %s98 = ssub.s32 128, %s97
          %s99 = sshll.u32 %s98, 4
          %100 = vsyncadd %s88, %s99
          %p101 = scmp.ne.s32.totalorder 0, %s97
          %s102 = smul.addr %s92, 2
          %s103 = smul.addr %s102, 8
          %s104 = scalar_lea.hbm %s0, %s103
          %s105 = smul.u32 16, %s95
          %s106 = sshll.u32 %s104, 4
          %s107 = int_to_ptr.hbm [resolvable:$true] %s106
          %s108 = sshll.u32 %s91, 4
          %s109 = int_to_ptr.vmem [resolvable:$true] %s108
          %s110 = sshll.u32 %s105, 4
          %114 = dma.hbm_to_vmem [thread:$0]  (%p101), %s107, %s110, %s109, %s88, 256, 256, 16
        $region20: #{tpu_custom_call.1} parent=15 // pred_fallthru
          _
      $region16: #{tpu_custom_call.1} parent=5 // pred_fallthru
        _
      %p115 = scmp.le.s32.totalorder 1, %s13
      %p116 = scmp.lt.s32.totalorder %s13, 5
      %p117 = pnand %p115, %p116
      %p118 = pneg %p117
      // Predicated region
      $region21: #{tpu_custom_call.1} parent=5 // pred_check
        _
      $region22: #{tpu_custom_call.1} parent=5 // pred_check_branch
        %120 = sbr.rel (%p117) target = $region24
      $region23: #{tpu_custom_call.1} parent=5 // pred_region
        %s121 = ssub.s32 %s13, 1
        %s122 = sand.u32 %s26, 1
        %s123 = scalar_lea.sflag [#allocation3], %s122
        %s124 = sand.u32 %s26, 1
        %s125 = smul.addr %s124, 128
        %s126 = scalar_lea.vmem [#allocation2], %s125
        // Predicated region
        $region25: #{tpu_custom_call.1} parent=23 // pred_check
          %p127 = pneg %p39
        $region26: #{tpu_custom_call.1} parent=23 // pred_check_branch
          %129 = sbr.rel (%p127) target = $region28
        $region27: #{tpu_custom_call.1} parent=23 // pred_region
          %131 = dma.done %s123, 2048
        $region28: #{tpu_custom_call.1} parent=23 // pred_fallthru
          _
        %s132 = sand.u32 %s26, 1
        %s133 = scalar_lea.sflag [#allocation3], %s132
        %s134 = sand.u32 %s26, 1
        %s135 = smul.addr %s134, 128
        %s136 = scalar_lea.vmem [#allocation2], %s135
        %p137 = pneg %p39
        %p138 = pneg %p36
        %p139 = pneg %p65
        %p140 = pneg %p62
        %s141 = sand.u32 %s52, 1
        %s142 = scalar_lea.sflag [#allocation4], %s141
        %s143 = sand.u32 %s52, 1
        %s144 = smul.addr %s143, 128
        %s145 = scalar_lea.vmem [#allocation5], %s144
        %s146 = smul.u32 8, %s18
        %s147 = ssub.s32 29, %s146
        %p148 = scmp.lt.s32.totalorder %s147, 8
        %s149 = scalar_select %p148, %s147, 8
        %s150 = smul.u32 8, %s149
        %s151 = smul.u32 %s150, 2
        %s152 = smul.u32 8, %s18
        %s153 = ssub.s32 29, %s152
        %p154 = scmp.lt.s32.totalorder %s153, 8
        %s155 = scalar_select %p154, %s153, 8
        %s156 = smul.u32 8, %s155
        %s157 = smul.u32 %s156, 2
        %v158 = vld [vmem:[%s126] sm:$0xff]
        %v159 = vld [vmem:[%s126 + $0x8] sm:$0xff]
        %v160 = vld [vmem:[%s126 + $0x10] sm:$0xff]
        %v161 = vld [vmem:[%s126 + $0x18] sm:$0xff]
        %v162 = vld [vmem:[%s126 + $0x20] sm:$0xff]
        %v163 = vld [vmem:[%s126 + $0x28] sm:$0xff]
        %v164 = vld [vmem:[%s126 + $0x30] sm:$0xff]
        %v165 = vld [vmem:[%s126 + $0x38] sm:$0xff]
        %v166 = vld [vmem:[%s126 + $0x40] sm:$0xff]
        %v167 = vld [vmem:[%s126 + $0x48] sm:$0xff]
        %v168 = vld [vmem:[%s126 + $0x50] sm:$0xff]
        %v169 = vld [vmem:[%s126 + $0x58] sm:$0xff]
        %v170 = vld [vmem:[%s126 + $0x60] sm:$0xff]
        %v171 = vld [vmem:[%s126 + $0x68] sm:$0xff]
        %v172 = vld [vmem:[%s126 + $0x70] sm:$0xff]
        %v173 = vld [vmem:[%s126 + $0x78] sm:$0xff]
        %v174 = vmul.f32 %v158, 0.01
        %v175 = vmul.f32 %v159, 0.01
        %v176 = vmul.f32 %v160, 0.01
        %v177 = vmul.f32 %v161, 0.01
        %v178 = vmul.f32 %v162, 0.01
        %v179 = vmul.f32 %v163, 0.01
        %v180 = vmul.f32 %v164, 0.01
        %v181 = vmul.f32 %v165, 0.01
        %v182 = vmul.f32 %v166, 0.01
        %v183 = vmul.f32 %v167, 0.01
        %v184 = vmul.f32 %v168, 0.01
        %v185 = vmul.f32 %v169, 0.01
        %v186 = vmul.f32 %v170, 0.01
        %v187 = vmul.f32 %v171, 0.01
        %v188 = vmul.f32 %v172, 0.01
        %v189 = vmul.f32 %v173, 0.01
        %v190 = vmax.f32 %v158, %v174
        %v191 = vmax.f32 %v159, %v175
        %v192 = vmax.f32 %v160, %v176
        %v193 = vmax.f32 %v161, %v177
        %v194 = vmax.f32 %v162, %v178
        %v195 = vmax.f32 %v163, %v179
        %v196 = vmax.f32 %v164, %v180
        %v197 = vmax.f32 %v165, %v181
        %v198 = vmax.f32 %v166, %v182
        %v199 = vmax.f32 %v167, %v183
        %v200 = vmax.f32 %v168, %v184
        %v201 = vmax.f32 %v169, %v185
        %v202 = vmax.f32 %v170, %v186
        %v203 = vmax.f32 %v171, %v187
        %v204 = vmax.f32 %v172, %v188
        %v205 = vmax.f32 %v173, %v189
        %206 = vst [vmem:[%s145] sm:$0xff] %v190
        %207 = vst [vmem:[%s145 + $0x8] sm:$0xff] %v191
        %208 = vst [vmem:[%s145 + $0x10] sm:$0xff] %v192
        %209 = vst [vmem:[%s145 + $0x18] sm:$0xff] %v193
        %210 = vst [vmem:[%s145 + $0x20] sm:$0xff] %v194
        %211 = vst [vmem:[%s145 + $0x28] sm:$0xff] %v195
        %212 = vst [vmem:[%s145 + $0x30] sm:$0xff] %v196
        %213 = vst [vmem:[%s145 + $0x38] sm:$0xff] %v197
        %214 = vst [vmem:[%s145 + $0x40] sm:$0xff] %v198
        %215 = vst [vmem:[%s145 + $0x48] sm:$0xff] %v199
        %216 = vst [vmem:[%s145 + $0x50] sm:$0xff] %v200
        %217 = vst [vmem:[%s145 + $0x58] sm:$0xff] %v201
        %218 = vst [vmem:[%s145 + $0x60] sm:$0xff] %v202
        %219 = vst [vmem:[%s145 + $0x68] sm:$0xff] %v203
        %220 = vst [vmem:[%s145 + $0x70] sm:$0xff] %v204
        %221 = vst [vmem:[%s145 + $0x78] sm:$0xff] %v205
        %s222 = sand.u32 %s52, 1
        %s223 = scalar_lea.sflag [#allocation4], %s222
        %s224 = sand.u32 %s52, 1
        %s225 = smul.addr %s224, 128
        %s226 = scalar_lea.vmem [#allocation5], %s225
        // Predicated region
        $region29: #{tpu_custom_call.1} parent=23 // pred_check
          %p227 = pneg %p62
        $region30: #{tpu_custom_call.1} parent=23 // pred_check_branch
          %229 = sbr.rel (%p227) target = $region32
        $region31: #{tpu_custom_call.1} parent=23 // pred_region
          %s230 = smul.u32 8, %s18
          %s231 = ssub.s32 29, %s230
          %p232 = scmp.lt.s32.totalorder %s231, 8
          %s233 = scalar_select %p232, %s231, 8
          %s234 = smul.u32 8, %s233
          %s235 = smul.u32 %s234, 2
          %s236 = ssub.s32 128, %s235
          %s237 = sshll.u32 %s236, 4
          %238 = vsyncadd %s223, %s237
          %p239 = scmp.ne.s32.totalorder 0, %s235
          %s240 = smul.addr %s230, 2
          %s241 = smul.addr %s240, 8
          %s242 = scalar_lea.hbm %s1, %s241
          %s243 = smul.u32 16, %s233
          %s244 = sshll.u32 %s226, 4
          %s245 = int_to_ptr.vmem [resolvable:$true] %s244
          %s246 = sshll.u32 %s242, 4
          %s247 = int_to_ptr.hbm [resolvable:$true] %s246
          %s248 = sshll.u32 %s243, 4
          %252 = dma.vmem_to_hbm [thread:$0]  (%p239), %s245, %s248, %s247, %s223, 256, 256, 16
        $region32: #{tpu_custom_call.1} parent=23 // pred_fallthru
          _
      $region24: #{tpu_custom_call.1} parent=5 // pred_fallthru
        _
      %p253 = scmp.le.s32.totalorder 2, %s13
      // Predicated region
      $region33: #{tpu_custom_call.1} parent=5 // pred_check
        %p254 = pneg %p253
      $region34: #{tpu_custom_call.1} parent=5 // pred_check_branch
        %256 = sbr.rel (%p254) target = $region36
      $region35: #{tpu_custom_call.1} parent=5 // pred_region
        %s257 = ssub.s32 %s13, 2
        // Predicated region
        $region37: #{tpu_custom_call.1} parent=35 // pred_check
          %p258 = pneg %p68
        $region38: #{tpu_custom_call.1} parent=35 // pred_check_branch
          %260 = sbr.rel (%p258) target = $region40
        $region39: #{tpu_custom_call.1} parent=35 // pred_region
          %s261 = sand.u32 %s53, 1
          %s262 = scalar_lea.sflag [#allocation4], %s261
          %s263 = sand.u32 %s53, 1
          %s264 = smul.addr %s263, 128
          %s265 = scalar_lea.vmem [#allocation5], %s264
          %267 = dma.done %s262, 2048
        $region40: #{tpu_custom_call.1} parent=35 // pred_fallthru
          _
      $region36: #{tpu_custom_call.1} parent=5 // pred_fallthru
        _
    $region6: #{tpu_custom_call.1} parent=1 // loop_footer
      %s17 = sadd.s32 1, %s13
    $region7: #{tpu_custom_call.1} parent=1 // loop_footer_branch
      %12 = sbr.rel target = $region3
    $region8: #{tpu_custom_call.1} parent=1 // loop_exit
      _
    %268 = vsyncpa [#allocation3], 1
    %s269 = scalar_lea.sflag [#allocation3], 1
    %270 = vsyncpa %s269, 1
    %271 = vsyncpa [#allocation4], 1
    %s272 = scalar_lea.sflag [#allocation4], 1
    %273 = vsyncpa %s272, 1

</llo_original>
